<compile_context>
chip_gen: v5e
topology: v5e:2x2
jax: 0.10.0
libtpu: 0.0.40
codegen_flags: <defaults>
</compile_context>

<pallas_src>
import functools
import math

import jax
import jax.numpy as jnp
from jax import lax
from jax.experimental import pallas as pl
from jax.experimental.pallas import tpu as pltpu


# ----------------------------------------------------------------------------
# Kernel: per-row normalization + diagonal affine on a (tm, C) tile.
# ----------------------------------------------------------------------------
def _norm_kernel(x_ref, g_ref, b_ref, o_ref, *, eps, inv_c):
    x = x_ref[...].astype(jnp.float32)                       # [tm, C]
    # Single-pass statistics: one read of the tile feeds both reductions.
    sx = jnp.sum(x, axis=-1, keepdims=True)                  # XLU reduce
    sxx = jnp.sum(x * x, axis=-1, keepdims=True)             # XLU reduce
    mean = sx * inv_c
    var = jnp.maximum(sxx * inv_c - mean * mean, 0.0)        # guard cancellation
    scale = lax.rsqrt(var + eps)                             # rsqrt -> EUP
    y = (x - mean) * scale * g_ref[...] + b_ref[...]         # g/b already f32
    o_ref[...] = y.astype(o_ref.dtype)


def _round_up(n, m):
    return ((n + m - 1) // m) * m


def _vmem_capacity_bytes():
    """Per-core VMEM capacity; conservative fallback if the query fails."""
    try:
        cap = int(getattr(pltpu.get_tpu_info(), "vmem_capacity_bytes", 0))
        if cap > 0:
            return cap
    except Exception:
        pass
    return 64 * 1024 * 1024  # v7x per-TC value (smallest current generation)


def _pick_tile(M, C, in_itemsize, out_itemsize, max_block_rows):
    """Row-tile size + scoped-VMEM limit from a per-generation byte budget."""
    vmem_cap = _vmem_capacity_bytes()
    budget = vmem_cap // 3                       # ~1/3 of VMEM for pipeline bufs
    # Per row: double-buffered input + output, plus ~2 f32 temporaries (the
    # upcast tile and the fused output value) that live inside the kernel.
    per_row = C * (2 * in_itemsize + 2 * out_itemsize + 2 * 4)
    tm = max(8, (budget // per_row) // 8 * 8)
    tm = min(tm, max_block_rows, _round_up(M, 8))
    footprint = tm * per_row + 2 * C * 4         # + resident g/b
    vmem_limit = min(vmem_cap * 3 // 4, max(32 << 20, footprint * 3 // 2))
    return tm, int(vmem_limit)


# ----------------------------------------------------------------------------
# Wrapper: flatten leading dims to rows, tile rows, pipeline over the grid.
# ----------------------------------------------------------------------------
def norm(x, g, b, *, eps=1e-5, max_block_rows=1024):
    # TODO(synk): only dim=-1 (the module's default) is implemented; other
    # reduction dims would need a transposed layout.
    orig_shape = x.shape
    C = orig_shape[-1]
    assert g.shape == (C,) and b.shape == (C,)
    M = math.prod(orig_shape[:-1]) if len(orig_shape) > 1 else 1
    xm = x.reshape(M, C)

    # Pad rows only to the next multiple of 8 (sublane alignment) -- never to
    # a multiple of the tile. The ragged last row-block is masked by Pallas.
    Mp = _round_up(M, 8)
    if Mp != M:
        xm = jnp.pad(xm, ((0, Mp - M), (0, 0)))

    in_item = jnp.dtype(x.dtype).itemsize
    out_item = in_item
    max_block_rows = max(8, (int(max_block_rows) // 8) * 8)
    tm, vmem_limit = _pick_tile(Mp, C, in_item, out_item, max_block_rows)
    grid = (pl.cdiv(Mp, tm),)

    # Pre-cast affine params to f32 once; they stay resident across the grid.
    g2 = g.reshape(1, C).astype(jnp.float32)
    b2 = b.reshape(1, C).astype(jnp.float32)

    kern = functools.partial(_norm_kernel, eps=eps, inv_c=1.0 / C)
    out = pl.pallas_call(
        kern,
        out_shape=jax.ShapeDtypeStruct((Mp, C), x.dtype),
        grid=grid,
        in_specs=[
            pl.BlockSpec((tm, C), lambda i: (i, 0)),   # x row-tile
            pl.BlockSpec((1, C), lambda i: (0, 0)),    # g (resident, f32)
            pl.BlockSpec((1, C), lambda i: (0, 0)),    # b (resident, f32)
        ],
        out_specs=pl.BlockSpec((tm, C), lambda i: (i, 0)),
        compiler_params=pltpu.CompilerParams(
            dimension_semantics=("parallel",),
            vmem_limit_bytes=vmem_limit),
        cost_estimate=pl.CostEstimate(
            flops=7 * Mp * C,
            transcendentals=Mp,
            bytes_accessed=Mp * C * (in_item + out_item) + 2 * C * 4),
    )(xm, g2, b2)

    if Mp != M:
        out = out[:M]
    return out.reshape(orig_shape)


# ----------------------------------------------------------------------------
# Pure-JAX reference (mirrors the PyTorch forward) for verification.
# ----------------------------------------------------------------------------
def ref_norm(x, g, b, eps=1e-5):
    u = jnp.mean(x, axis=-1, keepdims=True)
    xmu = x - u
    s = jnp.mean(xmu * xmu, axis=-1, keepdims=True)
    return xmu * lax.rsqrt(s + eps) * g + b


if __name__ == "__main__":
    key = jax.random.PRNGKey(0)
    kx, kg, kb, k2, k3 = jax.random.split(key, 5)

    # Small shape consistent with the module's use: [batch, seq, hidden].
    B, T, C = 2, 8, 32
    x = jax.random.normal(kx, (B, T, C), jnp.float32)
    g = 1.0 + 0.1 * jax.random.normal(kg, (C,), jnp.float32)
    b = 0.1 * jax.random.normal(kb, (C,), jnp.float32)

    out = norm(x, g, b)
    jax.block_until_ready(out)
    ref = ref_norm(x, g, b)
    assert out.shape == x.shape
    assert jnp.allclose(out, ref, atol=1e-4, rtol=1e-4), "norm mismatch (small)"

    # Larger case with a forced small tile: exercises multiple grid steps and
    # a ragged (masked) last row-block (1000 rows, 128-row tiles -> 8 blocks).
    M2, C2 = 1000, 256
    x2 = jax.random.normal(k2, (M2, C2), jnp.float32)
    g2 = 1.0 + 0.05 * jax.random.normal(kg, (C2,), jnp.float32)
    b2 = 0.05 * jax.random.normal(kb, (C2,), jnp.float32)
    out2 = norm(x2, g2, b2, max_block_rows=128)
    jax.block_until_ready(out2)
    ref2 = ref_norm(x2, g2, b2)
    assert jnp.allclose(out2, ref2, atol=1e-4, rtol=1e-4), "norm mismatch (large)"

    # bf16 inputs: exercises the f32 upcast / downcast path.
    M3, C3 = 64, 512
    x3 = jax.random.normal(k3, (M3, C3), jnp.float32).astype(jnp.bfloat16)
    g3 = jnp.ones((C3,), jnp.float32)
    b3 = jnp.zeros((C3,), jnp.float32)
    out3 = norm(x3, g3, b3)
    jax.block_until_ready(out3)
    ref3 = ref_norm(x3.astype(jnp.float32), g3, b3)
    assert out3.dtype == jnp.bfloat16
    assert jnp.allclose(out3.astype(jnp.float32), ref3, atol=5e-2, rtol=5e-2), \
        "norm mismatch (bf16)"

    print("KERNEL_OK")
</pallas_src>

<mosaic_0001>
module attributes {stable_mosaic.version = 11 : i64} {
  func.func @_norm_kernel(%arg0: i32, %arg1: memref<16x32xf32, #tpu.memory_space<vmem>>, %arg2: memref<1x32xf32, #tpu.memory_space<vmem>>, %arg3: memref<1x32xf32, #tpu.memory_space<vmem>>, %arg4: memref<16x32xf32, #tpu.memory_space<vmem>>) attributes {dimension_semantics = [#tpu.dimension_semantics<parallel>], iteration_bounds = array<i64: 1>, scalar_prefetch = 0 : i64, scratch_operands = 0 : i64, tpu.core_type = #tpu.core_type<tc>, window_params = [{transform_indices = @transform_0, window_bounds = array<i64: 16, 32>}, {pipeline_mode = #tpu.pipeline_mode<synchronous>, transform_indices = @transform_1, window_bounds = array<i64: 1, 32>}, {pipeline_mode = #tpu.pipeline_mode<synchronous>, transform_indices = @transform_2, window_bounds = array<i64: 1, 32>}, {transform_indices = @transform_3, window_bounds = array<i64: 16, 32>}]} {
    %c0 = arith.constant 0 : index
    %c0_0 = arith.constant 0 : index
    %0 = vector.load %arg1[%c0, %c0_0] : memref<16x32xf32, #tpu.memory_space<vmem>>, vector<16x32xf32>
    %cst = arith.constant dense<0.000000e+00> : vector<16xf32>
    %1 = vector.multi_reduction <add>, %0, %cst [1] : vector<16x32xf32> to vector<16xf32>
    %2 = vector.shape_cast %1 : vector<16xf32> to vector<16x1xf32>
    %3 = arith.mulf %0, %0 : vector<16x32xf32>
    %cst_1 = arith.constant dense<0.000000e+00> : vector<16xf32>
    %4 = vector.multi_reduction <add>, %3, %cst_1 [1] : vector<16x32xf32> to vector<16xf32>
    %5 = vector.shape_cast %4 : vector<16xf32> to vector<16x1xf32>
    %cst_2 = arith.constant 3.125000e-02 : f32
    %6 = vector.broadcast %cst_2 : f32 to vector<16x1xf32>
    %7 = arith.mulf %2, %6 : vector<16x1xf32>
    %cst_3 = arith.constant 3.125000e-02 : f32
    %8 = vector.broadcast %cst_3 : f32 to vector<16x1xf32>
    %9 = arith.mulf %5, %8 : vector<16x1xf32>
    %10 = arith.mulf %7, %7 : vector<16x1xf32>
    %11 = arith.subf %9, %10 : vector<16x1xf32>
    %cst_4 = arith.constant 0.000000e+00 : f32
    %12 = vector.broadcast %cst_4 : f32 to vector<16x1xf32>
    %13 = arith.maximumf %11, %12 : vector<16x1xf32>
    %cst_5 = arith.constant 9.99999974E-6 : f32
    %14 = vector.broadcast %cst_5 : f32 to vector<16x1xf32>
    %15 = arith.addf %13, %14 : vector<16x1xf32>
    %16 = math.rsqrt %15 : vector<16x1xf32>
    %17 = vector.broadcast %7 : vector<16x1xf32> to vector<16x32xf32>
    %18 = arith.subf %0, %17 : vector<16x32xf32>
    %19 = vector.broadcast %16 : vector<16x1xf32> to vector<16x32xf32>
    %20 = arith.mulf %18, %19 : vector<16x32xf32>
    %c0_6 = arith.constant 0 : index
    %c0_7 = arith.constant 0 : index
    %21 = vector.load %arg2[%c0_6, %c0_7] : memref<1x32xf32, #tpu.memory_space<vmem>>, vector<1x32xf32>
    %22 = vector.broadcast %21 : vector<1x32xf32> to vector<16x32xf32>
    %23 = arith.mulf %20, %22 : vector<16x32xf32>
    %c0_8 = arith.constant 0 : index
    %c0_9 = arith.constant 0 : index
    %24 = vector.load %arg3[%c0_8, %c0_9] : memref<1x32xf32, #tpu.memory_space<vmem>>, vector<1x32xf32>
    %25 = vector.broadcast %24 : vector<1x32xf32> to vector<16x32xf32>
    %26 = arith.addf %23, %25 : vector<16x32xf32>
    %c0_10 = arith.constant 0 : index
    %c0_11 = arith.constant 0 : index
    %27 = vector.load %arg4[%c0_10, %c0_11] : memref<16x32xf32, #tpu.memory_space<vmem>>, vector<16x32xf32>
    tpu.vector_store %arg4[%c0_10, %c0_11], %26 {strides = array<i32>} : memref<16x32xf32, #tpu.memory_space<vmem>>, vector<16x32xf32>,
    return
  }
  func.func @transform_0(%arg0: i32) -> (i32, i32) {
    %c0_i32 = arith.constant 0 : i32
    %c0_i32_0 = arith.constant 0 : i32
    return %arg0, %c0_i32 : i32, i32
  }
  func.func @transform_1(%arg0: i32) -> (i32, i32) {
    %c0_i32 = arith.constant 0 : i32
    %c0_i32_0 = arith.constant 0 : i32
    %c0_i32_1 = arith.constant 0 : i32
    return %c0_i32, %c0_i32_0 : i32, i32
  }
  func.func @transform_2(%arg0: i32) -> (i32, i32) {
    %c0_i32 = arith.constant 0 : i32
    %c0_i32_0 = arith.constant 0 : i32
    %c0_i32_1 = arith.constant 0 : i32
    return %c0_i32, %c0_i32_0 : i32, i32
  }
  func.func @transform_3(%arg0: i32) -> (i32, i32) {
    %c0_i32 = arith.constant 0 : i32
    %c0_i32_0 = arith.constant 0 : i32
    return %arg0, %c0_i32 : i32, i32
  }
}

</mosaic_0001>

<llo_original>
// kernel: tpu_custom_call.1
$region0: #{tpu_custom_call.1}
  #allocation0 [shape = 'u32[]', space=smem, size = 0x4, offset = 0x4, fixed_abs, tag = 'smem constant byte address 0x4 - core index']
  #allocation1 [shape = 'u32[72,128]{1,0:T(1,128)}', space=vmem, size = 0x9000, scoped, tag = 'internal scratch']
  %s0 = inlined_call_operand.hbm [shape: f32[16,32], index: 0, kind: input, shape index: {}]
  %s1 = inlined_call_operand.hbm [shape: f32[1,32], index: 1, kind: input, shape index: {}]
  %s2 = inlined_call_operand.vmem [shape: f32[1,32], index: 2, kind: input, shape index: {}]
  %s3 = inlined_call_operand.hbm [shape: f32[16,32], index: 3, kind: output, shape index: {}]
  %s4 = sld [smem:[#allocation0]]
  $region30: #{tpu_custom_call.1} parent=0
    _
  %s6 = ssub.s32 1, %s4
  %s7 = scalar_select 0, %s6, %s4
  $region1: #{tpu_custom_call.1} parent=0
    #allocation2 [shape = 'u8[8192]{0}', space=vmem, size = 0x2000, scoped, tag = 'input window, operand 0, single buffered']
    #allocation3 [shape = 's32[1]{0}', space=sflag, size = 0x4, scoped, tag = 'scoped memory for tpu_custom_call.1']
    #allocation4 [shape = 's32[1]{0}', space=sflag, size = 0x4, scoped, tag = 'scoped memory for tpu_custom_call.1']
    #allocation5 [shape = 'u8[512]{0}', space=vmem, size = 0x400, scoped, tag = 'input window, operand 1, single buffered']
    #allocation6 [shape = 's32[1]{0}', space=sflag, size = 0x4, scoped, tag = 'scoped memory for tpu_custom_call.1']
    #allocation7 [shape = 'u8[8192]{0}', space=vmem, size = 0x2000, scoped, tag = 'output window, operand 0, single buffered']
    %8 = vsyncpa [#allocation3], 0
    %9 = vsyncpa [#allocation6], 0
    %10 = vsyncpa [#allocation4], 0
    // Predicated region
    $region2: #{tpu_custom_call.1} parent=1 // pred_check
      _
    $region3: #{tpu_custom_call.1} parent=1 // pred_check_branch
      %12 = sbr.rel (0) target = $region5
    $region4: #{tpu_custom_call.1} parent=1 // pred_region
      %14 = vsyncadd [#allocation3], 0
      %s15 = sshll.u32 %s0, 4
      %s16 = int_to_ptr.hbm [resolvable:$true] %s15
      %s17 = sshll.u32 [#allocation2], 4
      %s18 = int_to_ptr.vmem [resolvable:$true] %s17
      %23 = dma.hbm_to_vmem [thread:$0]  %s16, 256, %s18, [#allocation3], 128, 128, 8
    $region5: #{tpu_custom_call.1} parent=1 // pred_fallthru
      _
    // Predicated region
    $region6: #{tpu_custom_call.1} parent=1 // pred_check
      _
    $region7: #{tpu_custom_call.1} parent=1 // pred_check_branch
      %25 = sbr.rel (0) target = $region9
    $region8: #{tpu_custom_call.1} parent=1 // pred_region
      %27 = vsyncadd [#allocation6], 0
      %s29 = sshll.u32 %s1, 4
      %s30 = int_to_ptr.hbm [resolvable:$true] %s29
      %s31 = sshll.u32 [#allocation5], 4
      %s32 = int_to_ptr.vmem [resolvable:$true] %s31
      %34 = dma.hbm_to_vmem [thread:$0]  %s30, 16, %s32, [#allocation6]
    $region9: #{tpu_custom_call.1} parent=1 // pred_fallthru
      _
    // Predicated region
    $region10: #{tpu_custom_call.1} parent=1 // pred_check
      _
    $region11: #{tpu_custom_call.1} parent=1 // pred_check_branch
      %36 = sbr.rel (0) target = $region13
    $region12: #{tpu_custom_call.1} parent=1 // pred_region
      _
    $region13: #{tpu_custom_call.1} parent=1 // pred_fallthru
      _
    // Predicated region
    $region14: #{tpu_custom_call.1} parent=1 // pred_check
      _
    $region15: #{tpu_custom_call.1} parent=1 // pred_check_branch
      %38 = sbr.rel (0) target = $region17
    $region16: #{tpu_custom_call.1} parent=1 // pred_region
      %40 = dma.done [#allocation3], 256
    $region17: #{tpu_custom_call.1} parent=1 // pred_fallthru
      _
    // Predicated region
    $region18: #{tpu_custom_call.1} parent=1 // pred_check
      _
    $region19: #{tpu_custom_call.1} parent=1 // pred_check_branch
      %42 = sbr.rel (0) target = $region21
    $region20: #{tpu_custom_call.1} parent=1 // pred_region
      %44 = dma.done [#allocation6], 16
    $region21: #{tpu_custom_call.1} parent=1 // pred_fallthru
      _
    %v45 = vld [vmem:[#allocation2] sm:$0xff]
    %v46 = vld [vmem:[#allocation2 + $0x8] sm:$0xff]
    %vm47 = vcmask 261120
    %v48 = vsel %vm47, %v45, 0.0
    %49 = vadd.xlane.f32.xlu0 %v48
    %v50 = vpop.xlane.xlu0 %49
    %v51 = vsel %vm47, %v46, 0.0
    %52 = vadd.xlane.f32.xlu0 %v51
    %v53 = vpop.xlane.xlu0 %52
    %v54 = vmul.f32 %v45, %v45
    %v55 = vmul.f32 %v46, %v46
    %v56 = vsel %vm47, %v54, 0.0
    %57 = vadd.xlane.f32.xlu0 %v56
    %v58 = vpop.xlane.xlu0 %57
    %v59 = vsel %vm47, %v55, 0.0
    %60 = vadd.xlane.f32.xlu0 %v59
    %v61 = vpop.xlane.xlu0 %60
    %v62 = vmul.f32 %v50, 0.03125
    %v63 = vmul.f32 %v53, 0.03125
    %v64 = vmul.f32 %v58, 0.03125
    %v65 = vmul.f32 %v61, 0.03125
    %v66 = vmul.f32 %v62, %v62
    %v67 = vmul.f32 %v63, %v63
    %v68 = vsub.f32 %v64, %v66
    %v69 = vsub.f32 %v65, %v67
    %v70 = vmax.f32 %v68, 0.0
    %v71 = vmax.f32 %v69, 0.0
    %v72 = vadd.f32 %v70, 1e-05
    %v73 = vadd.f32 %v71, 1e-05
    %v74 = vrsqrt.pop %v72
    %v75 = vmul.f32 %v74, %v72
    %v76 = vmul.f32 %v75, %v74
    %v77 = vmul.f32 0.5, %v76
    %v78 = vsub.f32 1.5, %v77
    %v79 = vmul.f32 %v74, %v78
    %vm80 = vweird.f32 %v72
    %vm81 = vweird.f32 %v74
    %vm82 = vmor %vm80, %vm81
    %v83 = vsel %vm82, %v74, %v79
    %v84 = vrsqrt.pop %v73
    %v85 = vmul.f32 %v84, %v73
    %v86 = vmul.f32 %v85, %v84
    %v87 = vmul.f32 0.5, %v86
    %v88 = vsub.f32 1.5, %v87
    %v89 = vmul.f32 %v84, %v88
    %vm90 = vweird.f32 %v73
    %vm91 = vweird.f32 %v84
    %vm92 = vmor %vm90, %vm91
    %v93 = vsel %vm92, %v84, %v89
    %v94 = vsub.f32 %v45, %v62
    %v95 = vsub.f32 %v46, %v63
    %v96 = vmul.f32 %v94, %v83
    %v97 = vmul.f32 %v95, %v93
    %v98 = vld [vmem:[#allocation5] sm:$0x1]
    %v100 = vperm.slane %v98, 0
    %v102 = vmul.f32 %v96, %v100
    %v103 = vmul.f32 %v97, %v100
    %v104 = vld [vmem:[%s2] sm:$0x1]
    %v106 = vperm.slane %v104, 0
    %v108 = vadd.f32 %v102, %v106
    %v109 = vadd.f32 %v103, %v106
    %110 = vst.msk [vmem:[#allocation7] sm:$0xff] %vm47, %v108
    %111 = vst.msk [vmem:[#allocation7 + $0x8] sm:$0xff] %vm47, %v109
    // Predicated region
    $region22: #{tpu_custom_call.1} parent=1 // pred_check
      _
    $region23: #{tpu_custom_call.1} parent=1 // pred_check_branch
      %113 = sbr.rel (0) target = $region25
    $region24: #{tpu_custom_call.1} parent=1 // pred_region
      %115 = vsyncadd [#allocation4], 0
      %s116 = sshll.u32 [#allocation7], 4
      %s117 = int_to_ptr.vmem [resolvable:$true] %s116
      %s118 = sshll.u32 %s3, 4
      %s119 = int_to_ptr.hbm [resolvable:$true] %s118
      %124 = dma.vmem_to_hbm [thread:$0]  %s117, 256, %s119, [#allocation4], 128, 128, 8
    $region25: #{tpu_custom_call.1} parent=1 // pred_fallthru
      _
    // Predicated region
    $region26: #{tpu_custom_call.1} parent=1 // pred_check
      _
    $region27: #{tpu_custom_call.1} parent=1 // pred_check_branch
      %126 = sbr.rel (0) target = $region29
    $region28: #{tpu_custom_call.1} parent=1 // pred_region
      %128 = dma.done [#allocation4], 256
    $region29: #{tpu_custom_call.1} parent=1 // pred_fallthru
      _
    %129 = vsyncpa [#allocation3], 1
    %130 = vsyncpa [#allocation6], 1
    %131 = vsyncpa [#allocation4], 1

</llo_original>
